<compile_context>
chip_gen: v7x
topology: tpu7x:2x2x1
jax: 0.10.0
libtpu: 0.0.40
codegen_flags: <defaults>
</compile_context>

<pallas_src>
import functools
import math
import string

import jax
import jax.numpy as jnp
from jax import lax
from jax.experimental import pallas as pl
from jax.experimental.pallas import tpu as pltpu

ALL_LETTERS = string.ascii_letters + " .,;'"
N_LETTERS = len(ALL_LETTERS)                     # 57  (input_size)
N_HIDDEN = 128                                   # n_hidden in the original script
N_CATEGORIES = 18                                # classic tutorial has 18 languages
N_OUT_PAD = 128                                  # lane-dense padded classifier width
NEG_PAD = -1e30                                  # bias for padded logit lanes


def gru_seq_kernel(gi_ref,                       # (L_pad, 3H) pre-gathered input-gate rows
                   whh_ref, bhn_ref,             # (H, 3H) recurrent weights, (1, H) b_hn
                   h0_ref,                       # (1, H) initial hidden
                   wl_ref, bl_ref,               # (H, 128), (1, 128) padded classifier
                   logp_ref, hn_ref,             # outputs: (L_pad, 128) log-probs, (1, H) h_n
                   hs_scr,                       # VMEM (L_pad, H): per-step hidden states
                   *, seq_len):
    """PyTorch GRU semantics (gate order r, z, n):

        r  = sigmoid(gi_r + W_hr h)          # b_ir + b_hr folded into gi_r
        z  = sigmoid(gi_z + W_hz h)          # b_iz + b_hz folded into gi_z
        n  = tanh  (gi_n + r * (W_hn h + b_hn))   # b_in folded into gi_n
        h' = (1 - z) * n + z * h

    followed by one batched Linear + LogSoftmax over all stored h_t.
    """
    H = N_HIDDEN
    # Zero the scratch so padded rows stay finite through the classifier.
    hs_scr[...] = jnp.zeros_like(hs_scr)
    # Carry the hidden state directly in the resident hn output block.
    hn_ref[...] = h0_ref[...]

    @pl.loop(0, seq_len, unroll=True)
    def _(t):
        h = hn_ref[...]                                                   # (1, H)
        gi = gi_ref[pl.ds(t, 1), :]                                       # (1, 3H)
        gh = jnp.dot(h, whh_ref[...], preferred_element_type=jnp.float32)  # (1, 3H)
        # H == 128 -> every slice below is a whole 128-lane block.
        r = jax.nn.sigmoid(gi[:, 0:H] + gh[:, 0:H])
        z = jax.nn.sigmoid(gi[:, H:2 * H] + gh[:, H:2 * H])
        n = jnp.tanh(gi[:, 2 * H:3 * H] + r * (gh[:, 2 * H:3 * H] + bhn_ref[...]))
        h_new = (1.0 - z) * n + z * h
        hn_ref[...] = h_new
        hs_scr[pl.ds(t, 1), :] = h_new

    # One MXU-friendly (L_pad, H) @ (H, 128) classifier matmul + batched
    # LogSoftmax; padded lanes have zero weight columns and a -1e30 bias, so
    # exp underflows to 0 and they do not perturb the max / log-sum-exp.
    logits = jnp.dot(hs_scr[...], wl_ref[...],
                     preferred_element_type=jnp.float32) + bl_ref[...]
    m = jnp.max(logits, axis=-1, keepdims=True)
    shifted = logits - m
    lse = jnp.log(jnp.sum(jnp.exp(shifted), axis=-1, keepdims=True))
    logp_ref[...] = shifted - lse


def prepare_kernel_params(params):
    """Repack PyTorch-layout params into the kernel's layout."""
    wih_t, whh_t, bih, bhh, wl_t, bl = params
    H = N_HIDDEN
    # Fold b_ih (all gates) + b_hr, b_hz into the per-letter row table.
    # b_hn must stay separate: it sits inside r * (W_hn h + b_hn).
    bhh_rz = jnp.concatenate([bhh[:, :2 * H], jnp.zeros((1, H), jnp.float32)], axis=-1)
    gi_table = wih_t + bih + bhh_rz                 # (N_LETTERS, 3H)
    bhn = bhh[:, 2 * H:3 * H]                       # (1, H)
    # Lane-dense classifier: zero weight columns + -1e30 bias on padded lanes.
    wl_pad = jnp.pad(wl_t, ((0, 0), (0, N_OUT_PAD - N_CATEGORIES)))
    bl_pad = jnp.pad(bl, ((0, 0), (0, N_OUT_PAD - N_CATEGORIES)),
                     constant_values=NEG_PAD)
    return gi_table, whh_t, bhn, wl_pad, bl_pad


def _gru_sequence(gi_all, whh_t, bhn, h0, wl_pad, bl_pad, seq_len):
    L_pad = gi_all.shape[0]
    kernel = functools.partial(gru_seq_kernel, seq_len=seq_len)
    logp_pad, hn = pl.pallas_call(
        kernel,
        out_shape=(
            jax.ShapeDtypeStruct((L_pad, N_OUT_PAD), jnp.float32),
            jax.ShapeDtypeStruct((1, N_HIDDEN), jnp.float32),
        ),
        scratch_shapes=[pltpu.VMEM((L_pad, N_HIDDEN), jnp.float32)],
    )(gi_all, whh_t, bhn, h0, wl_pad, bl_pad)
    return logp_pad, hn


def gru_forward(x_seq, hidden, params):
    """Mirrors GRU.forward for a one-hot character sequence.

    x_seq:  (L, 1, n_letters) one-hot (lineToTensor output); L may be 1.
    hidden: (num_layers=1, batch=1, n_hidden)
    returns (log_probs (L, 1, n_categories), hn (1, 1, n_hidden))
    """
    L = x_seq.shape[0]
    L_pad = ((L + 7) // 8) * 8
    # The input is one-hot by construction -> only the letter index is needed.
    letter_idx = jnp.argmax(x_seq.reshape(L, N_LETTERS), axis=-1).astype(jnp.int32)
    gi_table, whh_t, bhn, wl_pad, bl_pad = prepare_kernel_params(params)
    # Gather the per-letter gate rows once, outside the recurrence.
    gi_all = jnp.pad(gi_table[letter_idx], ((0, L_pad - L), (0, 0)))      # (L_pad, 3H)
    h0 = hidden.reshape(1, N_HIDDEN).astype(jnp.float32)
    logp_pad, hn = _gru_sequence(gi_all, whh_t, bhn, h0, wl_pad, bl_pad, L)
    return logp_pad[:L, None, :N_CATEGORIES], hn.reshape(1, 1, N_HIDDEN)


def init_params(key, input_size, hidden_size, output_size):
    """PyTorch-style U(-1/sqrt(H), 1/sqrt(H)) init; weights stored transposed (x @ W^T)."""
    k = jax.random.split(key, 6)
    s = 1.0 / math.sqrt(hidden_size)
    wih_t = jax.random.uniform(k[0], (input_size, 3 * hidden_size), jnp.float32, -s, s)
    whh_t = jax.random.uniform(k[1], (hidden_size, 3 * hidden_size), jnp.float32, -s, s)
    bih = jax.random.uniform(k[2], (1, 3 * hidden_size), jnp.float32, -s, s)
    bhh = jax.random.uniform(k[3], (1, 3 * hidden_size), jnp.float32, -s, s)
    wl_t = jax.random.uniform(k[4], (hidden_size, output_size), jnp.float32, -s, s)
    bl = jax.random.uniform(k[5], (1, output_size), jnp.float32, -s, s)
    return wih_t, whh_t, bih, bhh, wl_t, bl


def line_to_tensor(line):
    """JAX analogue of lineToTensor: (len(line), 1, n_letters) one-hot."""
    t = jnp.zeros((len(line), 1, N_LETTERS), jnp.float32)
    for li, letter in enumerate(line):
        t = t.at[li, 0, ALL_LETTERS.find(letter)].set(1.0)
    return t


def gru_reference(letter_idx, hidden, params):
    """Pure-JAX (non-Pallas) reference of the same forward pass."""
    wih_t, whh_t, bih, bhh, wl_t, bl = params
    H = N_HIDDEN
    h = hidden.reshape(1, H)
    outs = []
    for i in range(letter_idx.shape[0]):
        x = jax.nn.one_hot(letter_idx[i], N_LETTERS, dtype=jnp.float32)[None, :]
        gi = x @ wih_t + bih
        gh = h @ whh_t + bhh
        r = jax.nn.sigmoid(gi[:, :H] + gh[:, :H])
        z = jax.nn.sigmoid(gi[:, H:2 * H] + gh[:, H:2 * H])
        n = jnp.tanh(gi[:, 2 * H:] + r * gh[:, 2 * H:])
        h = (1.0 - z) * n + z * h
        logits = h @ wl_t + bl
        outs.append(jax.nn.log_softmax(logits, axis=-1))
    return jnp.stack(outs, axis=0), h


if __name__ == "__main__":
    key = jax.random.PRNGKey(0)
    params = init_params(key, N_LETTERS, N_HIDDEN, N_CATEGORIES)

    line = "Bai"                                    # same name as the original script
    x_seq = line_to_tensor(line)                    # (3, 1, 57) one-hot
    hidden = jnp.zeros((1, 1, N_HIDDEN), jnp.float32)

    log_probs, hn = gru_forward(x_seq, hidden, params)
    jax.block_until_ready((log_probs, hn))

    assert log_probs.shape == (len(line), 1, N_CATEGORIES)
    assert hn.shape == (1, 1, N_HIDDEN)
    # every per-step LogSoftmax row must be a valid log-distribution
    probs_sum = jnp.sum(jnp.exp(log_probs), axis=-1)
    assert bool(jnp.all(jnp.abs(probs_sum - 1.0) < 1e-4))

    # cross-check against the pure-JAX reference
    letter_idx = jnp.argmax(x_seq.reshape(len(line), N_LETTERS), axis=-1).astype(jnp.int32)
    ref_lp, ref_h = gru_reference(letter_idx, hidden, params)
    assert bool(jnp.allclose(log_probs, ref_lp, atol=5e-3, rtol=5e-3))
    assert bool(jnp.allclose(hn.reshape(1, N_HIDDEN), ref_h, atol=5e-3, rtol=5e-3))

    print("KERNEL_OK")
</pallas_src>

<mosaic_0001>
module attributes {stable_mosaic.version = 11 : i64} {
  func.func @gru_seq_kernel(%arg0: memref<8x384xf32, #tpu.memory_space<vmem>>, %arg1: memref<128x384xf32, #tpu.memory_space<vmem>>, %arg2: memref<1x128xf32, #tpu.memory_space<vmem>>, %arg3: memref<1x128xf32, #tpu.memory_space<vmem>>, %arg4: memref<128x128xf32, #tpu.memory_space<vmem>>, %arg5: memref<1x128xf32, #tpu.memory_space<vmem>>, %arg6: memref<8x128xf32, #tpu.memory_space<vmem>>, %arg7: memref<1x128xf32, #tpu.memory_space<vmem>>, %arg8: memref<8x128xf32, #tpu.memory_space<vmem>>) attributes {dimension_semantics = [], scalar_prefetch = 0 : i64, scratch_operands = 1 : i64, tpu.core_type = #tpu.core_type<tc>} {
    %cst = arith.constant 0.000000e+00 : f32
    %0 = vector.broadcast %cst : f32 to vector<8x128xf32>
    %c0 = arith.constant 0 : index
    %c0_0 = arith.constant 0 : index
    %1 = vector.load %arg8[%c0, %c0_0] : memref<8x128xf32, #tpu.memory_space<vmem>>, vector<8x128xf32>
    tpu.vector_store %arg8[%c0, %c0_0], %0 {strides = array<i32>} : memref<8x128xf32, #tpu.memory_space<vmem>>, vector<8x128xf32>,
    %c0_1 = arith.constant 0 : index
    %c0_2 = arith.constant 0 : index
    %2 = vector.load %arg3[%c0_1, %c0_2] : memref<1x128xf32, #tpu.memory_space<vmem>>, vector<1x128xf32>
    %c0_3 = arith.constant 0 : index
    %c0_4 = arith.constant 0 : index
    %3 = vector.load %arg7[%c0_3, %c0_4] : memref<1x128xf32, #tpu.memory_space<vmem>>, vector<1x128xf32>
    tpu.vector_store %arg7[%c0_3, %c0_4], %2 {strides = array<i32>} : memref<1x128xf32, #tpu.memory_space<vmem>>, vector<1x128xf32>,
    %c0_i32 = arith.constant 0 : i32
    %c1_i32 = arith.constant 1 : i32
    %4 = arith.muli %c0_i32, %c1_i32 : i32
    %c0_i32_5 = arith.constant 0 : i32
    %5 = arith.addi %c0_i32_5, %4 : i32
    %c0_6 = arith.constant 0 : index
    %c0_7 = arith.constant 0 : index
    %6 = vector.load %arg7[%c0_6, %c0_7] : memref<1x128xf32, #tpu.memory_space<vmem>>, vector<1x128xf32>
    %7 = arith.index_cast %5 : i32 to index
    %c0_8 = arith.constant 0 : index
    %8 = vector.load %arg0[%7, %c0_8] : memref<8x384xf32, #tpu.memory_space<vmem>>, vector<1x384xf32>
    %c0_9 = arith.constant 0 : index
    %c0_10 = arith.constant 0 : index
    %9 = vector.load %arg1[%c0_9, %c0_10] : memref<128x384xf32, #tpu.memory_space<vmem>>, vector<128x384xf32>
    %cst_11 = arith.constant dense<0.000000e+00> : vector<1x384xf32>
    %10 = tpu.matmul %6, %9, %cst_11 {dimension_numbers = #tpu.dot_dimension_numbers<[1], [0], [0], [1], [0, 0, 1, 1], [], []>} : vector<1x128xf32>, vector<128x384xf32>, vector<1x384xf32> -> vector<1x384xf32>
    %11 = vector.extract_strided_slice %8 {offsets = [0, 0], sizes = [1, 128], strides = [1, 1]} : vector<1x384xf32> to vector<1x128xf32>
    %12 = vector.extract_strided_slice %10 {offsets = [0, 0], sizes = [1, 128], strides = [1, 1]} : vector<1x384xf32> to vector<1x128xf32>
    %13 = arith.addf %11, %12 : vector<1x128xf32>
    %14 = arith.negf %13 : vector<1x128xf32>
    %15 = math.exp %14 : vector<1x128xf32>
    %cst_12 = arith.constant 1.000000e+00 : f32
    %16 = vector.broadcast %cst_12 : f32 to vector<1x128xf32>
    %17 = arith.addf %16, %15 : vector<1x128xf32>
    %18 = arith.divf %16, %17 : vector<1x128xf32>
    %19 = vector.extract_strided_slice %8 {offsets = [0, 128], sizes = [1, 128], strides = [1, 1]} : vector<1x384xf32> to vector<1x128xf32>
    %20 = vector.extract_strided_slice %10 {offsets = [0, 128], sizes = [1, 128], strides = [1, 1]} : vector<1x384xf32> to vector<1x128xf32>
    %21 = arith.addf %19, %20 : vector<1x128xf32>
    %22 = arith.negf %21 : vector<1x128xf32>
    %23 = math.exp %22 : vector<1x128xf32>
    %cst_13 = arith.constant 1.000000e+00 : f32
    %24 = vector.broadcast %cst_13 : f32 to vector<1x128xf32>
    %25 = arith.addf %24, %23 : vector<1x128xf32>
    %26 = arith.divf %24, %25 : vector<1x128xf32>
    %27 = vector.extract_strided_slice %8 {offsets = [0, 256], sizes = [1, 128], strides = [1, 1]} : vector<1x384xf32> to vector<1x128xf32>
    %28 = vector.extract_strided_slice %10 {offsets = [0, 256], sizes = [1, 128], strides = [1, 1]} : vector<1x384xf32> to vector<1x128xf32>
    %c0_14 = arith.constant 0 : index
    %c0_15 = arith.constant 0 : index
    %29 = vector.load %arg2[%c0_14, %c0_15] : memref<1x128xf32, #tpu.memory_space<vmem>>, vector<1x128xf32>
    %30 = arith.addf %28, %29 : vector<1x128xf32>
    %31 = arith.mulf %18, %30 : vector<1x128xf32>
    %32 = arith.addf %27, %31 : vector<1x128xf32>
    %33 = math.tanh %32 : vector<1x128xf32>
    %cst_16 = arith.constant 1.000000e+00 : f32
    %34 = vector.broadcast %cst_16 : f32 to vector<1x128xf32>
    %35 = arith.subf %34, %26 : vector<1x128xf32>
    %36 = arith.mulf %35, %33 : vector<1x128xf32>
    %37 = arith.mulf %26, %6 : vector<1x128xf32>
    %38 = arith.addf %36, %37 : vector<1x128xf32>
    %c0_17 = arith.constant 0 : index
    %c0_18 = arith.constant 0 : index
    %39 = vector.load %arg7[%c0_17, %c0_18] : memref<1x128xf32, #tpu.memory_space<vmem>>, vector<1x128xf32>
    tpu.vector_store %arg7[%c0_17, %c0_18], %38 {strides = array<i32>} : memref<1x128xf32, #tpu.memory_space<vmem>>, vector<1x128xf32>,
    %40 = arith.index_cast %5 : i32 to index
    %c0_19 = arith.constant 0 : index
    %41 = vector.load %arg8[%40, %c0_19] : memref<8x128xf32, #tpu.memory_space<vmem>>, vector<1x128xf32>
    tpu.vector_store %arg8[%40, %c0_19], %38 {strides = array<i32>} : memref<8x128xf32, #tpu.memory_space<vmem>>, vector<1x128xf32>,
    %c1_i32_20 = arith.constant 1 : i32
    %c1_i32_21 = arith.constant 1 : i32
    %42 = arith.muli %c1_i32_20, %c1_i32_21 : i32
    %c0_i32_22 = arith.constant 0 : i32
    %43 = arith.addi %c0_i32_22, %42 : i32
    %c0_23 = arith.constant 0 : index
    %c0_24 = arith.constant 0 : index
    %44 = vector.load %arg7[%c0_23, %c0_24] : memref<1x128xf32, #tpu.memory_space<vmem>>, vector<1x128xf32>
    %45 = arith.index_cast %43 : i32 to index
    %c0_25 = arith.constant 0 : index
    %46 = vector.load %arg0[%45, %c0_25] : memref<8x384xf32, #tpu.memory_space<vmem>>, vector<1x384xf32>
    %c0_26 = arith.constant 0 : index
    %c0_27 = arith.constant 0 : index
    %47 = vector.load %arg1[%c0_26, %c0_27] : memref<128x384xf32, #tpu.memory_space<vmem>>, vector<128x384xf32>
    %cst_28 = arith.constant dense<0.000000e+00> : vector<1x384xf32>
    %48 = tpu.matmul %44, %47, %cst_28 {dimension_numbers = #tpu.dot_dimension_numbers<[1], [0], [0], [1], [0, 0, 1, 1], [], []>} : vector<1x128xf32>, vector<128x384xf32>, vector<1x384xf32> -> vector<1x384xf32>
    %49 = vector.extract_strided_slice %46 {offsets = [0, 0], sizes = [1, 128], strides = [1, 1]} : vector<1x384xf32> to vector<1x128xf32>
    %50 = vector.extract_strided_slice %48 {offsets = [0, 0], sizes = [1, 128], strides = [1, 1]} : vector<1x384xf32> to vector<1x128xf32>
    %51 = arith.addf %49, %50 : vector<1x128xf32>
    %52 = arith.negf %51 : vector<1x128xf32>
    %53 = math.exp %52 : vector<1x128xf32>
    %cst_29 = arith.constant 1.000000e+00 : f32
    %54 = vector.broadcast %cst_29 : f32 to vector<1x128xf32>
    %55 = arith.addf %54, %53 : vector<1x128xf32>
    %56 = arith.divf %54, %55 : vector<1x128xf32>
    %57 = vector.extract_strided_slice %46 {offsets = [0, 128], sizes = [1, 128], strides = [1, 1]} : vector<1x384xf32> to vector<1x128xf32>
    %58 = vector.extract_strided_slice %48 {offsets = [0, 128], sizes = [1, 128], strides = [1, 1]} : vector<1x384xf32> to vector<1x128xf32>
    %59 = arith.addf %57, %58 : vector<1x128xf32>
    %60 = arith.negf %59 : vector<1x128xf32>
    %61 = math.exp %60 : vector<1x128xf32>
    %cst_30 = arith.constant 1.000000e+00 : f32
    %62 = vector.broadcast %cst_30 : f32 to vector<1x128xf32>
    %63 = arith.addf %62, %61 : vector<1x128xf32>
    %64 = arith.divf %62, %63 : vector<1x128xf32>
    %65 = vector.extract_strided_slice %46 {offsets = [0, 256], sizes = [1, 128], strides = [1, 1]} : vector<1x384xf32> to vector<1x128xf32>
    %66 = vector.extract_strided_slice %48 {offsets = [0, 256], sizes = [1, 128], strides = [1, 1]} : vector<1x384xf32> to vector<1x128xf32>
    %c0_31 = arith.constant 0 : index
    %c0_32 = arith.constant 0 : index
    %67 = vector.load %arg2[%c0_31, %c0_32] : memref<1x128xf32, #tpu.memory_space<vmem>>, vector<1x128xf32>
    %68 = arith.addf %66, %67 : vector<1x128xf32>
    %69 = arith.mulf %56, %68 : vector<1x128xf32>
    %70 = arith.addf %65, %69 : vector<1x128xf32>
    %71 = math.tanh %70 : vector<1x128xf32>
    %cst_33 = arith.constant 1.000000e+00 : f32
    %72 = vector.broadcast %cst_33 : f32 to vector<1x128xf32>
    %73 = arith.subf %72, %64 : vector<1x128xf32>
    %74 = arith.mulf %73, %71 : vector<1x128xf32>
    %75 = arith.mulf %64, %44 : vector<1x128xf32>
    %76 = arith.addf %74, %75 : vector<1x128xf32>
    %c0_34 = arith.constant 0 : index
    %c0_35 = arith.constant 0 : index
    %77 = vector.load %arg7[%c0_34, %c0_35] : memref<1x128xf32, #tpu.memory_space<vmem>>, vector<1x128xf32>
    tpu.vector_store %arg7[%c0_34, %c0_35], %76 {strides = array<i32>} : memref<1x128xf32, #tpu.memory_space<vmem>>, vector<1x128xf32>,
    %78 = arith.index_cast %43 : i32 to index
    %c0_36 = arith.constant 0 : index
    %79 = vector.load %arg8[%78, %c0_36] : memref<8x128xf32, #tpu.memory_space<vmem>>, vector<1x128xf32>
    tpu.vector_store %arg8[%78, %c0_36], %76 {strides = array<i32>} : memref<8x128xf32, #tpu.memory_space<vmem>>, vector<1x128xf32>,
    %c2_i32 = arith.constant 2 : i32
    %c1_i32_37 = arith.constant 1 : i32
    %80 = arith.muli %c2_i32, %c1_i32_37 : i32
    %c0_i32_38 = arith.constant 0 : i32
    %81 = arith.addi %c0_i32_38, %80 : i32
    %c0_39 = arith.constant 0 : index
    %c0_40 = arith.constant 0 : index
    %82 = vector.load %arg7[%c0_39, %c0_40] : memref<1x128xf32, #tpu.memory_space<vmem>>, vector<1x128xf32>
    %83 = arith.index_cast %81 : i32 to index
    %c0_41 = arith.constant 0 : index
    %84 = vector.load %arg0[%83, %c0_41] : memref<8x384xf32, #tpu.memory_space<vmem>>, vector<1x384xf32>
    %c0_42 = arith.constant 0 : index
    %c0_43 = arith.constant 0 : index
    %85 = vector.load %arg1[%c0_42, %c0_43] : memref<128x384xf32, #tpu.memory_space<vmem>>, vector<128x384xf32>
    %cst_44 = arith.constant dense<0.000000e+00> : vector<1x384xf32>
    %86 = tpu.matmul %82, %85, %cst_44 {dimension_numbers = #tpu.dot_dimension_numbers<[1], [0], [0], [1], [0, 0, 1, 1], [], []>} : vector<1x128xf32>, vector<128x384xf32>, vector<1x384xf32> -> vector<1x384xf32>
    %87 = vector.extract_strided_slice %84 {offsets = [0, 0], sizes = [1, 128], strides = [1, 1]} : vector<1x384xf32> to vector<1x128xf32>
    %88 = vector.extract_strided_slice %86 {offsets = [0, 0], sizes = [1, 128], strides = [1, 1]} : vector<1x384xf32> to vector<1x128xf32>
    %89 = arith.addf %87, %88 : vector<1x128xf32>
    %90 = arith.negf %89 : vector<1x128xf32>
    %91 = math.exp %90 : vector<1x128xf32>
    %cst_45 = arith.constant 1.000000e+00 : f32
    %92 = vector.broadcast %cst_45 : f32 to vector<1x128xf32>
    %93 = arith.addf %92, %91 : vector<1x128xf32>
    %94 = arith.divf %92, %93 : vector<1x128xf32>
    %95 = vector.extract_strided_slice %84 {offsets = [0, 128], sizes = [1, 128], strides = [1, 1]} : vector<1x384xf32> to vector<1x128xf32>
    %96 = vector.extract_strided_slice %86 {offsets = [0, 128], sizes = [1, 128], strides = [1, 1]} : vector<1x384xf32> to vector<1x128xf32>
    %97 = arith.addf %95, %96 : vector<1x128xf32>
    %98 = arith.negf %97 : vector<1x128xf32>
    %99 = math.exp %98 : vector<1x128xf32>
    %cst_46 = arith.constant 1.000000e+00 : f32
    %100 = vector.broadcast %cst_46 : f32 to vector<1x128xf32>
    %101 = arith.addf %100, %99 : vector<1x128xf32>
    %102 = arith.divf %100, %101 : vector<1x128xf32>
    %103 = vector.extract_strided_slice %84 {offsets = [0, 256], sizes = [1, 128], strides = [1, 1]} : vector<1x384xf32> to vector<1x128xf32>
    %104 = vector.extract_strided_slice %86 {offsets = [0, 256], sizes = [1, 128], strides = [1, 1]} : vector<1x384xf32> to vector<1x128xf32>
    %c0_47 = arith.constant 0 : index
    %c0_48 = arith.constant 0 : index
    %105 = vector.load %arg2[%c0_47, %c0_48] : memref<1x128xf32, #tpu.memory_space<vmem>>, vector<1x128xf32>
    %106 = arith.addf %104, %105 : vector<1x128xf32>
    %107 = arith.mulf %94, %106 : vector<1x128xf32>
    %108 = arith.addf %103, %107 : vector<1x128xf32>
    %109 = math.tanh %108 : vector<1x128xf32>
    %cst_49 = arith.constant 1.000000e+00 : f32
    %110 = vector.broadcast %cst_49 : f32 to vector<1x128xf32>
    %111 = arith.subf %110, %102 : vector<1x128xf32>
    %112 = arith.mulf %111, %109 : vector<1x128xf32>
    %113 = arith.mulf %102, %82 : vector<1x128xf32>
    %114 = arith.addf %112, %113 : vector<1x128xf32>
    %c0_50 = arith.constant 0 : index
    %c0_51 = arith.constant 0 : index
    %115 = vector.load %arg7[%c0_50, %c0_51] : memref<1x128xf32, #tpu.memory_space<vmem>>, vector<1x128xf32>
    tpu.vector_store %arg7[%c0_50, %c0_51], %114 {strides = array<i32>} : memref<1x128xf32, #tpu.memory_space<vmem>>, vector<1x128xf32>,
    %116 = arith.index_cast %81 : i32 to index
    %c0_52 = arith.constant 0 : index
    %117 = vector.load %arg8[%116, %c0_52] : memref<8x128xf32, #tpu.memory_space<vmem>>, vector<1x128xf32>
    tpu.vector_store %arg8[%116, %c0_52], %114 {strides = array<i32>} : memref<8x128xf32, #tpu.memory_space<vmem>>, vector<1x128xf32>,
    %c3_i32 = arith.constant 3 : i32
    %c0_53 = arith.constant 0 : index
    %c0_54 = arith.constant 0 : index
    %118 = vector.load %arg8[%c0_53, %c0_54] : memref<8x128xf32, #tpu.memory_space<vmem>>, vector<8x128xf32>
    %c0_55 = arith.constant 0 : index
    %c0_56 = arith.constant 0 : index
    %119 = vector.load %arg4[%c0_55, %c0_56] : memref<128x128xf32, #tpu.memory_space<vmem>>, vector<128x128xf32>
    %cst_57 = arith.constant dense<0.000000e+00> : vector<8x128xf32>
    %120 = tpu.matmul %118, %119, %cst_57 {dimension_numbers = #tpu.dot_dimension_numbers<[1], [0], [0], [1], [0, 0, 1, 1], [], []>} : vector<8x128xf32>, vector<128x128xf32>, vector<8x128xf32> -> vector<8x128xf32>
    %c0_58 = arith.constant 0 : index
    %c0_59 = arith.constant 0 : index
    %121 = vector.load %arg5[%c0_58, %c0_59] : memref<1x128xf32, #tpu.memory_space<vmem>>, vector<1x128xf32>
    %122 = vector.broadcast %121 : vector<1x128xf32> to vector<8x128xf32>
    %123 = arith.addf %120, %122 : vector<8x128xf32>
    %cst_60 = arith.constant dense<0xFF800000> : vector<8xf32>
    %124 = vector.multi_reduction <maximumf>, %123, %cst_60 [1] : vector<8x128xf32> to vector<8xf32>
    %125 = vector.shape_cast %124 : vector<8xf32> to vector<8x1xf32>
    %126 = vector.broadcast %125 : vector<8x1xf32> to vector<8x128xf32>
    %127 = arith.subf %123, %126 : vector<8x128xf32>
    %128 = math.exp %127 : vector<8x128xf32>
    %cst_61 = arith.constant dense<0.000000e+00> : vector<8xf32>
    %129 = vector.multi_reduction <add>, %128, %cst_61 [1] : vector<8x128xf32> to vector<8xf32>
    %130 = vector.shape_cast %129 : vector<8xf32> to vector<8x1xf32>
    %131 = math.log %130 : vector<8x1xf32>
    %132 = vector.broadcast %131 : vector<8x1xf32> to vector<8x128xf32>
    %133 = arith.subf %127, %132 : vector<8x128xf32>
    %c0_62 = arith.constant 0 : index
    %c0_63 = arith.constant 0 : index
    %134 = vector.load %arg6[%c0_62, %c0_63] : memref<8x128xf32, #tpu.memory_space<vmem>>, vector<8x128xf32>
    tpu.vector_store %arg6[%c0_62, %c0_63], %133 {strides = array<i32>} : memref<8x128xf32, #tpu.memory_space<vmem>>, vector<8x128xf32>,
    return
  }
}

</mosaic_0001>

<llo_original>
// kernel: tpu_custom_call.1
$region0: #{tpu_custom_call.1}
  #allocation0 [shape = 'u32[]', space=smem, size = 0x4, offset = 0x4, fixed_abs, tag = 'smem constant byte address 0x4 - core index']
  #allocation1 [shape = 'u32[144,128]{1,0:T(1,128)}', space=vmem, size = 0x12000, scoped, tag = 'internal scratch']
  #allocation2 [shape = 'f32[8,128]{1,0:T(8,128)}', space=vmem, size = 0x1000, scoped, tag = 'scratch operand']
  %s0 = inlined_call_operand.hbm [shape: f32[8,384], index: 0, kind: input, shape index: {}]
  %s1 = inlined_call_operand.hbm [shape: f32[128,384], index: 1, kind: input, shape index: {}]
  %s2 = inlined_call_operand.vmem [shape: f32[1,128], index: 2, kind: input, shape index: {}]
  %s3 = inlined_call_operand.vmem [shape: f32[1,128], index: 3, kind: input, shape index: {}]
  %s4 = inlined_call_operand.hbm [shape: f32[128,128], index: 4, kind: input, shape index: {}]
  %s5 = inlined_call_operand.vmem [shape: f32[1,128], index: 5, kind: input, shape index: {}]
  %s6 = inlined_call_operand.hbm [shape: f32[8,128], index: 6, kind: output, shape index: {0}]
  %s7 = inlined_call_operand.hbm [shape: f32[1,128], index: 7, kind: output, shape index: {1}]
  %8 = xla_tuple %s6, %s7
  %s9 = sld [smem:[#allocation0]]
  $region54: #{tpu_custom_call.1} parent=0
    _
  %s11 = ssub.s32 1, %s9
  %s12 = scalar_select 0, %s11, %s9
  $region1: #{tpu_custom_call.1} parent=0
    #allocation3 [shape = 'u8[12288]{0}', space=vmem, size = 0x3000, scoped, tag = 'input window, operand 0, single buffered']
    #allocation4 [shape = 's32[1]{0}', space=sflag, size = 0x4, scoped, tag = 'scoped memory for tpu_custom_call.1']
    #allocation5 [shape = 's32[1]{0}', space=sflag, size = 0x4, scoped, tag = 'scoped memory for tpu_custom_call.1']
    #allocation6 [shape = 'u8[196608]{0}', space=vmem, size = 0x30000, scoped, tag = 'input window, operand 1, single buffered']
    #allocation7 [shape = 's32[1]{0}', space=sflag, size = 0x4, scoped, tag = 'scoped memory for tpu_custom_call.1']
    #allocation8 [shape = 'u8[65536]{0}', space=vmem, size = 0x10000, scoped, tag = 'input window, operand 4, single buffered']
    #allocation9 [shape = 'u8[4096]{0}', space=vmem, size = 0x1000, scoped, tag = 'output window, operand 0, single buffered']
    #allocation10 [shape = 'u8[512]{0}', space=vmem, size = 0x400, scoped, tag = 'output window, operand 1, single buffered']
    #allocation11 [shape = 's32[1]{0}', space=sflag, size = 0x4, scoped, tag = 'scoped memory for tpu_custom_call.1']
    %13 = vsyncpa [#allocation4], 0
    %14 = vsyncpa [#allocation7], 0
    %15 = vsyncpa [#allocation5], 0
    %16 = vsyncpa [#allocation11], 0
    // Predicated region
    $region2: #{tpu_custom_call.1} parent=1 // pred_check
      _
    $region3: #{tpu_custom_call.1} parent=1 // pred_check_branch
      %18 = sbr.rel (0) target = $region5
    $region4: #{tpu_custom_call.1} parent=1 // pred_region
      %s20 = ssub.s32 384, 384
      %21 = vsyncadd [#allocation4], %s20
      %s23 = sshll.u32 [#allocation3], 4
      %s24 = int_to_ptr.vmem [resolvable:$true] %s23
      %26 = dma.hbm_to_vmem [thread:$0]  %s0, 384, %s24, [#allocation4]
    $region5: #{tpu_custom_call.1} parent=1 // pred_fallthru
      _
    // Predicated region
    $region6: #{tpu_custom_call.1} parent=1 // pred_check
      _
    $region7: #{tpu_custom_call.1} parent=1 // pred_check_branch
      %28 = sbr.rel (0) target = $region9
    $region8: #{tpu_custom_call.1} parent=1 // pred_region
      %s30 = ssub.s32 6144, 6144
      %31 = vsyncadd [#allocation7], %s30
      %s32 = sshll.u32 [#allocation6], 4
      %s33 = int_to_ptr.vmem [resolvable:$true] %s32
      %38 = dma.hbm_to_vmem [thread:$0]  %s1, 6144, %s33, [#allocation7], 384, 384, 24
    $region9: #{tpu_custom_call.1} parent=1 // pred_fallthru
      _
    // Predicated region
    $region10: #{tpu_custom_call.1} parent=1 // pred_check
      _
    $region11: #{tpu_custom_call.1} parent=1 // pred_check_branch
      %40 = sbr.rel (0) target = $region13
    $region12: #{tpu_custom_call.1} parent=1 // pred_region
      _
    $region13: #{tpu_custom_call.1} parent=1 // pred_fallthru
      _
    // Predicated region
    $region14: #{tpu_custom_call.1} parent=1 // pred_check
      _
    $region15: #{tpu_custom_call.1} parent=1 // pred_check_branch
      %42 = sbr.rel (0) target = $region17
    $region16: #{tpu_custom_call.1} parent=1 // pred_region
      _
    $region17: #{tpu_custom_call.1} parent=1 // pred_fallthru
      _
    // Predicated region
    $region18: #{tpu_custom_call.1} parent=1 // pred_check
      _
    $region19: #{tpu_custom_call.1} parent=1 // pred_check_branch
      %44 = sbr.rel (0) target = $region21
    $region20: #{tpu_custom_call.1} parent=1 // pred_region
      %s46 = ssub.s32 2048, 2048
      %47 = vsyncadd [#allocation7], %s46
      %s48 = sshll.u32 [#allocation8], 4
      %s49 = int_to_ptr.vmem [resolvable:$true] %s48
      %54 = dma.hbm_to_vmem [thread:$0]  %s4, 2048, %s49, [#allocation7], 128, 128, 8
    $region21: #{tpu_custom_call.1} parent=1 // pred_fallthru
      _
    // Predicated region
    $region22: #{tpu_custom_call.1} parent=1 // pred_check
      _
    $region23: #{tpu_custom_call.1} parent=1 // pred_check_branch
      %56 = sbr.rel (0) target = $region25
    $region24: #{tpu_custom_call.1} parent=1 // pred_region
      _
    $region25: #{tpu_custom_call.1} parent=1 // pred_fallthru
      _
    // Predicated region
    $region26: #{tpu_custom_call.1} parent=1 // pred_check
      _
    $region27: #{tpu_custom_call.1} parent=1 // pred_check_branch
      %58 = sbr.rel (0) target = $region29
    $region28: #{tpu_custom_call.1} parent=1 // pred_region
      %59 = dma.done [#allocation4], 384
    $region29: #{tpu_custom_call.1} parent=1 // pred_fallthru
      _
    // Predicated region
    $region30: #{tpu_custom_call.1} parent=1 // pred_check
      _
    $region31: #{tpu_custom_call.1} parent=1 // pred_check_branch
      %61 = sbr.rel (0) target = $region33
    $region32: #{tpu_custom_call.1} parent=1 // pred_region
      %62 = dma.done [#allocation7], 6144
    $region33: #{tpu_custom_call.1} parent=1 // pred_fallthru
      _
    // Predicated region
    $region34: #{tpu_custom_call.1} parent=1 // pred_check
      _
    $region35: #{tpu_custom_call.1} parent=1 // pred_check_branch
      %64 = sbr.rel (0) target = $region37
    $region36: #{tpu_custom_call.1} parent=1 // pred_region
      %65 = dma.done [#allocation7], 2048
    $region37: #{tpu_custom_call.1} parent=1 // pred_fallthru
      _
    %66 = vst [vmem:[#allocation2] sm:$0xff] 0.0
    %v67 = vld [vmem:[%s3] sm:$0x1]
    %68 = vst [vmem:[#allocation10] sm:$0x1] %v67
    %v69 = vld [vmem:[#allocation10] sm:$0x1]
    %v70 = vld [vmem:[#allocation3] ss:$8 sm:$0x7]
    %v71 = vld [vmem:[#allocation6] sm:$0xff]
    %v72 = vld [vmem:[#allocation6 + $0x8] sm:$0xff]
    %v73 = vld [vmem:[#allocation6 + $0x10] sm:$0xff]
    %v74 = vld [vmem:[#allocation6 + $0x18] sm:$0xff]
    %v75 = vld [vmem:[#allocation6 + $0x20] sm:$0xff]
    %v76 = vld [vmem:[#allocation6 + $0x28] sm:$0xff]
    %v77 = vld [vmem:[#allocation6 + $0x30] sm:$0xff]
    %v78 = vld [vmem:[#allocation6 + $0x38] sm:$0xff]
    %v79 = vld [vmem:[#allocation6 + $0x40] sm:$0xff]
    %v80 = vld [vmem:[#allocation6 + $0x48] sm:$0xff]
    %v81 = vld [vmem:[#allocation6 + $0x50] sm:$0xff]
    %v82 = vld [vmem:[#allocation6 + $0x58] sm:$0xff]
    %v83 = vld [vmem:[#allocation6 + $0x60] sm:$0xff]
    %v84 = vld [vmem:[#allocation6 + $0x68] sm:$0xff]
    %v85 = vld [vmem:[#allocation6 + $0x70] sm:$0xff]
    %v86 = vld [vmem:[#allocation6 + $0x78] sm:$0xff]
    %v87 = vld [vmem:[#allocation6 + $0x80] sm:$0xff]
    %v88 = vld [vmem:[#allocation6 + $0x88] sm:$0xff]
    %v89 = vld [vmem:[#allocation6 + $0x90] sm:$0xff]
    %v90 = vld [vmem:[#allocation6 + $0x98] sm:$0xff]
    %v91 = vld [vmem:[#allocation6 + $0xa0] sm:$0xff]
    %v92 = vld [vmem:[#allocation6 + $0xa8] sm:$0xff]
    %v93 = vld [vmem:[#allocation6 + $0xb0] sm:$0xff]
    %v94 = vld [vmem:[#allocation6 + $0xb8] sm:$0xff]
    %v95 = vld [vmem:[#allocation6 + $0xc0] sm:$0xff]
    %v96 = vld [vmem:[#allocation6 + $0xc8] sm:$0xff]
    %v97 = vld [vmem:[#allocation6 + $0xd0] sm:$0xff]
    %v98 = vld [vmem:[#allocation6 + $0xd8] sm:$0xff]
    %v99 = vld [vmem:[#allocation6 + $0xe0] sm:$0xff]
    %v100 = vld [vmem:[#allocation6 + $0xe8] sm:$0xff]
    %v101 = vld [vmem:[#allocation6 + $0xf0] sm:$0xff]
    %v102 = vld [vmem:[#allocation6 + $0xf8] sm:$0xff]
    %v103 = vld [vmem:[#allocation6 + $0x100] sm:$0xff]
    %v104 = vld [vmem:[#allocation6 + $0x108] sm:$0xff]
    %v105 = vld [vmem:[#allocation6 + $0x110] sm:$0xff]
    %v106 = vld [vmem:[#allocation6 + $0x118] sm:$0xff]
    %v107 = vld [vmem:[#allocation6 + $0x120] sm:$0xff]
    %v108 = vld [vmem:[#allocation6 + $0x128] sm:$0xff]
    %v109 = vld [vmem:[#allocation6 + $0x130] sm:$0xff]
    %v110 = vld [vmem:[#allocation6 + $0x138] sm:$0xff]
    %v111 = vld [vmem:[#allocation6 + $0x140] sm:$0xff]
    %v112 = vld [vmem:[#allocation6 + $0x148] sm:$0xff]
    %v113 = vld [vmem:[#allocation6 + $0x150] sm:$0xff]
    %v114 = vld [vmem:[#allocation6 + $0x158] sm:$0xff]
    %v115 = vld [vmem:[#allocation6 + $0x160] sm:$0xff]
    %v116 = vld [vmem:[#allocation6 + $0x168] sm:$0xff]
    %v117 = vld [vmem:[#allocation6 + $0x170] sm:$0xff]
    %v118 = vld [vmem:[#allocation6 + $0x178] sm:$0xff]
    %119 = vmatprep.subr.mxu0 %v72
    %120 = vmatpush1.msra.mxu0 %v71
    %121 = vmatprep.subr.mxu0 %v75
    %122 = vmatpush1.msra.mxu0 %v74
    %123 = vmatprep.subr.mxu0 %v78
    %124 = vmatpush1.msra.mxu0 %v77
    %125 = vmatprep.subr.mxu0 %v81
    %126 = vmatpush1.msra.mxu0 %v80
    %127 = vmatprep.subr.mxu0 %v84
    %128 = vmatpush1.msra.mxu0 %v83
    %129 = vmatprep.subr.mxu0 %v87
    %130 = vmatpush1.msra.mxu0 %v86
    %131 = vmatprep.subr.mxu0 %v90
    %132 = vmatpush1.msra.mxu0 %v89
    %133 = vmatprep.subr.mxu0 %v93
    %134 = vmatpush1.msra.mxu0 %v92
    %135 = vmatprep.subr.mxu0 %v96
    %136 = vmatpush1.msra.mxu0 %v95
    %137 = vmatprep.subr.mxu0 %v99
    %138 = vmatpush1.msra.mxu0 %v98
    %139 = vmatprep.subr.mxu0 %v102
    %140 = vmatpush1.msra.mxu0 %v101
    %141 = vmatprep.subr.mxu0 %v105
    %142 = vmatpush1.msra.mxu0 %v104
    %143 = vmatprep.subr.mxu0 %v108
    %144 = vmatpush1.msra.mxu0 %v107
    %145 = vmatprep.subr.mxu0 %v111
    %146 = vmatpush1.msra.mxu0 %v110
    %147 = vmatprep.subr.mxu0 %v114
    %148 = vmatpush1.msra.mxu0 %v113
    %149 = vmatprep.subr.mxu0 %v117
    %150 = vmatpush1.msra.mxu0 %v116
    %151 = vmatprep.subr.mxu0 0.0
    %152 = vmatpush1.msra.mxu0 0.0
    %153 = vmatprep.subr.mxu0 0.0
    %154 = vmatpush1.msra.mxu0 0.0
    %155 = vmatprep.subr.mxu0 0.0
    %156 = vmatpush1.msra.mxu0 0.0
    %157 = vmatprep.subr.mxu0 0.0
    %158 = vmatpush1.msra.mxu0 0.0
    %159 = vmatprep.subr.mxu0 0.0
    %160 = vmatpush1.msra.mxu0 0.0
    %161 = vmatprep.subr.mxu0 0.0
    %162 = vmatpush1.msra.mxu0 0.0
    %163 = vmatprep.subr.mxu0 0.0
    %164 = vmatpush1.msra.mxu0 0.0
    %165 = vmatprep.subr.mxu0 0.0
    %166 = vmatpush1.msra.mxu0 0.0
    %167 = vmatprep.subr.mxu0 0.0
    %168 = vmatpush1.msra.mxu0 0.0
    %169 = vmatprep.subr.mxu0 0.0
    %170 = vmatpush1.msra.mxu0 0.0
    %171 = vmatprep.subr.mxu0 0.0
    %172 = vmatpush1.msra.mxu0 0.0
    %173 = vmatprep.subr.mxu0 0.0
    %174 = vmatpush1.msra.mxu0 0.0
    %175 = vmatprep.subr.mxu0 0.0
    %176 = vmatpush1.msra.mxu0 0.0
    %177 = vmatprep.subr.mxu0 0.0
    %178 = vmatpush1.msra.mxu0 0.0
    %179 = vmatprep.subr.mxu0 0.0
    %180 = vmatpush1.msra.mxu0 0.0
    %181 = vmatprep.subr.mxu0 0.0
    %182 = vmatpush1.msra.mxu0 0.0
    %183 = vmatprep.mubr.f32.mxu0 0.0
    %184 = vmatmul.mubr.f32.gmra.mrb[0].mxu0 %v69
    %v185 = vpop.f32.mrb[0].mxu0
    %v186 = vadd.f32 0.0, %v185
    %v187 = vpop.f32.mrb[0].mxu0
    %v188 = vadd.f32 0.0, %v187
    %189 = vdwg.mxu0
    %190 = vmatprep.subr.mxu0 0.0
    %191 = vmatpush1.msra.mxu0 %v73
    %192 = vmatprep.subr.mxu0 0.0
    %193 = vmatpush1.msra.mxu0 %v76
    %194 = vmatprep.subr.mxu0 0.0
    %195 = vmatpush1.msra.mxu0 %v79
    %196 = vmatprep.subr.mxu0 0.0
    %197 = vmatpush1.msra.mxu0 %v82
    %198 = vmatprep.subr.mxu0 0.0
    %199 = vmatpush1.msra.mxu0 %v85
    %200 = vmatprep.subr.mxu0 0.0
    %201 = vmatpush1.msra.mxu0 %v88
    %202 = vmatprep.subr.mxu0 0.0
    %203 = vmatpush1.msra.mxu0 %v91
    %204 = vmatprep.subr.mxu0 0.0
    %205 = vmatpush1.msra.mxu0 %v94
    %206 = vmatprep.subr.mxu0 0.0
    %207 = vmatpush1.msra.mxu0 %v97
    %208 = vmatprep.subr.mxu0 0.0
    %209 = vmatpush1.msra.mxu0 %v100
    %210 = vmatprep.subr.mxu0 0.0
    %211 = vmatpush1.msra.mxu0 %v103
    %212 = vmatprep.subr.mxu0 0.0
    %213 = vmatpush1.msra.mxu0 %v106
    %214 = vmatprep.subr.mxu0 0.0
    %215 = vmatpush1.msra.mxu0 %v109
    %216 = vmatprep.subr.mxu0 0.0
    %217 = vmatpush1.msra.mxu0 %v112
    %218 = vmatprep.subr.mxu0 0.0
    %219 = vmatpush1.msra.mxu0 %v115
    %220 = vmatprep.subr.mxu0 0.0
    %221 = vmatpush1.msra.mxu0 %v118
    %222 = vmatprep.subr.mxu0 0.0
    %223 = vmatpush1.msra.mxu0 0.0
    %224 = vmatprep.subr.mxu0 0.0
    %225 = vmatpush1.msra.mxu0 0.0
    %226 = vmatprep.subr.mxu0 0.0
    %227 = vmatpush1.msra.mxu0 0.0
    %228 = vmatprep.subr.mxu0 0.0
    %229 = vmatpush1.msra.mxu0 0.0
    %230 = vmatprep.subr.mxu0 0.0
    %231 = vmatpush1.msra.mxu0 0.0
    %232 = vmatprep.subr.mxu0 0.0
    %233 = vmatpush1.msra.mxu0 0.0
    %234 = vmatprep.subr.mxu0 0.0
    %235 = vmatpush1.msra.mxu0 0.0
    %236 = vmatprep.subr.mxu0 0.0
    %237 = vmatpush1.msra.mxu0 0.0
    %238 = vmatprep.subr.mxu0 0.0
    %239 = vmatpush1.msra.mxu0 0.0
    %240 = vmatprep.subr.mxu0 0.0
    %241 = vmatpush1.msra.mxu0 0.0
    %242 = vmatprep.subr.mxu0 0.0
    %243 = vmatpush1.msra.mxu0 0.0
    %244 = vmatprep.subr.mxu0 0.0
    %245 = vmatpush1.msra.mxu0 0.0
    %246 = vmatprep.subr.mxu0 0.0
    %247 = vmatpush1.msra.mxu0 0.0
    %248 = vmatprep.subr.mxu0 0.0
    %249 = vmatpush1.msra.mxu0 0.0
    %250 = vmatprep.subr.mxu0 0.0
    %251 = vmatpush1.msra.mxu0 0.0
    %252 = vmatprep.subr.mxu0 0.0
    %253 = vmatpush1.msra.mxu0 0.0
    %254 = vmatprep.mubr.f32.mxu0 0.0
    %255 = vmatmul.mubr.f32.gmra.mrb[0].mxu0 %v69
    %v256 = vpop.f32.mrb[0].mxu0
    %v257 = vadd.f32 0.0, %v256
    %v258 = vpop.f32.mrb[0].mxu0
    %259 = vdwg.mxu0
    %v260 = vadd.f32 %v70, %v186
    %v261 = vxor.u32 %v260, 2147483648
    %v262 = vmul.f32 %v261, 1.442695
    %v263 = vpow.pop %v262
    %v264 = vadd.f32 %v263, 1.0
    %v265 = vrcp.pop %v264
    %v266 = vmul.f32 1.0, %v265
    %v268 = vrot.slane %v70, 1
    %v270 = vadd.f32 %v268, %v188
    %v271 = vxor.u32 %v270, 2147483648
    %v272 = vmul.f32 %v271, 1.442695
    %v273 = vpow.pop %v272
    %v274 = vadd.f32 %v273, 1.0
    %v275 = vrcp.pop %v274
    %v276 = vmul.f32 1.0, %v275
    %v277 = vld [vmem:[%s2] sm:$0x1]
    %v278 = vadd.f32 %v257, %v277
    %v279 = vmul.f32 %v266, %v278
    %v280 = vrot.slane %v70, 2
    %v282 = vadd.f32 %v280, %v279
    %v283 = vtanh.pop %v282
    %v284 = vsub.f32 1.0, %v276
    %v285 = vmul.f32 %v284, %v283
    %v286 = vmul.f32 %v276, %v69
    %v287 = vadd.f32 %v285, %v286
    %288 = vst [vmem:[#allocation10] sm:$0x1] %v287
    %289 = vst [vmem:[#allocation2] sm:$0x1] %v287
    %v290 = vld [vmem:[#allocation10] sm:$0x1]
    %s291 = scalar_lea.vmem [#allocation3], 1
    %v292 = vld [vmem:[%s291] ss:$8 sm:$0x7]
    %v293 = vld [vmem:[#allocation6] sm:$0xff]
    %v294 = vld [vmem:[#allocation6 + $0x8] sm:$0xff]
    %v295 = vld [vmem:[#allocation6 + $0x10] sm:$0xff]
    %v296 = vld [vmem:[#allocation6 + $0x18] sm:$0xff]
    %v297 = vld [vmem:[#allocation6 + $0x20] sm:$0xff]
    %v298 = vld [vmem:[#allocation6 + $0x28] sm:$0xff]
    %v299 = vld [vmem:[#allocation6 + $0x30] sm:$0xff]
    %v300 = vld [vmem:[#allocation6 + $0x38] sm:$0xff]
    %v301 = vld [vmem:[#allocation6 + $0x40] sm:$0xff]
    %v302 = vld [vmem:[#allocation6 + $0x48] sm:$0xff]
    %v303 = vld [vmem:[#allocation6 + $0x50] sm:$0xff]
    %v304 = vld [vmem:[#allocation6 + $0x58] sm:$0xff]
    %v305 = vld [vmem:[#allocation6 + $0x60] sm:$0xff]
    %v306 = vld [vmem:[#allocation6 + $0x68] sm:$0xff]
    %v307 = vld [vmem:[#allocation6 + $0x70] sm:$0xff]
    %v308 = vld [vmem:[#allocation6 + $0x78] sm:$0xff]
    %v309 = vld [vmem:[#allocation6 + $0x80] sm:$0xff]
    %v310 = vld [vmem:[#allocation6 + $0x88] sm:$0xff]
    %v311 = vld [vmem:[#allocation6 + $0x90] sm:$0xff]
    %v312 = vld [vmem:[#allocation6 + $0x98] sm:$0xff]
    %v313 = vld [vmem:[#allocation6 + $0xa0] sm:$0xff]
    %v314 = vld [vmem:[#allocation6 + $0xa8] sm:$0xff]
    %v315 = vld [vmem:[#allocation6 + $0xb0] sm:$0xff]
    %v316 = vld [vmem:[#allocation6 + $0xb8] sm:$0xff]
    %v317 = vld [vmem:[#allocation6 + $0xc0] sm:$0xff]
    %v318 = vld [vmem:[#allocation6 + $0xc8] sm:$0xff]
    %v319 = vld [vmem:[#allocation6 + $0xd0] sm:$0xff]
    %v320 = vld [vmem:[#allocation6 + $0xd8] sm:$0xff]
    %v321 = vld [vmem:[#allocation6 + $0xe0] sm:$0xff]
    %v322 = vld [vmem:[#allocation6 + $0xe8] sm:$0xff]
    %v323 = vld [vmem:[#allocation6 + $0xf0] sm:$0xff]
    %v324 = vld [vmem:[#allocation6 + $0xf8] sm:$0xff]
    %v325 = vld [vmem:[#allocation6 + $0x100] sm:$0xff]
    %v326 = vld [vmem:[#allocation6 + $0x108] sm:$0xff]
    %v327 = vld [vmem:[#allocation6 + $0x110] sm:$0xff]
    %v328 = vld [vmem:[#allocation6 + $0x118] sm:$0xff]
    %v329 = vld [vmem:[#allocation6 + $0x120] sm:$0xff]
    %v330 = vld [vmem:[#allocation6 + $0x128] sm:$0xff]
    %v331 = vld [vmem:[#allocation6 + $0x130] sm:$0xff]
    %v332 = vld [vmem:[#allocation6 + $0x138] sm:$0xff]
    %v333 = vld [vmem:[#allocation6 + $0x140] sm:$0xff]
    %v334 = vld [vmem:[#allocation6 + $0x148] sm:$0xff]
    %v335 = vld [vmem:[#allocation6 + $0x150] sm:$0xff]
    %v336 = vld [vmem:[#allocation6 + $0x158] sm:$0xff]
    %v337 = vld [vmem:[#allocation6 + $0x160] sm:$0xff]
    %v338 = vld [vmem:[#allocation6 + $0x168] sm:$0xff]
    %v339 = vld [vmem:[#allocation6 + $0x170] sm:$0xff]
    %v340 = vld [vmem:[#allocation6 + $0x178] sm:$0xff]
    %341 = vmatprep.subr.mxu0 %v294
    %342 = vmatpush1.msra.mxu0 %v293
    %343 = vmatprep.subr.mxu0 %v297
    %344 = vmatpush1.msra.mxu0 %v296
    %345 = vmatprep.subr.mxu0 %v300
    %346 = vmatpush1.msra.mxu0 %v299
    %347 = vmatprep.subr.mxu0 %v303
    %348 = vmatpush1.msra.mxu0 %v302
    %349 = vmatprep.subr.mxu0 %v306
    %350 = vmatpush1.msra.mxu0 %v305
    %351 = vmatprep.subr.mxu0 %v309
    %352 = vmatpush1.msra.mxu0 %v308
    %353 = vmatprep.subr.mxu0 %v312
    %354 = vmatpush1.msra.mxu0 %v311
    %355 = vmatprep.subr.mxu0 %v315
    %356 = vmatpush1.msra.mxu0 %v314
    %357 = vmatprep.subr.mxu0 %v318
    %358 = vmatpush1.msra.mxu0 %v317
    %359 = vmatprep.subr.mxu0 %v321
    %360 = vmatpush1.msra.mxu0 %v320
    %361 = vmatprep.subr.mxu0 %v324
    %362 = vmatpush1.msra.mxu0 %v323
    %363 = vmatprep.subr.mxu0 %v327
    %364 = vmatpush1.msra.mxu0 %v326
    %365 = vmatprep.subr.mxu0 %v330
    %366 = vmatpush1.msra.mxu0 %v329
    %367 = vmatprep.subr.mxu0 %v333
    %368 = vmatpush1.msra.mxu0 %v332
    %369 = vmatprep.subr.mxu0 %v336
    %370 = vmatpush1.msra.mxu0 %v335
    %371 = vmatprep.subr.mxu0 %v339
    %372 = vmatpush1.msra.mxu0 %v338
    %373 = vmatprep.subr.mxu0 0.0
    %374 = vmatpush1.msra.mxu0 0.0
    %375 = vmatprep.subr.mxu0 0.0
    %376 = vmatpush1.msra.mxu0 0.0
    %377 = vmatprep.subr.mxu0 0.0
    %378 = vmatpush1.msra.mxu0 0.0
    %379 = vmatprep.subr.mxu0 0.0
    %380 = vmatpush1.msra.mxu0 0.0
    %381 = vmatprep.subr.mxu0 0.0
    %382 = vmatpush1.msra.mxu0 0.0
    %383 = vmatprep.subr.mxu0 0.0
    %384 = vmatpush1.msra.mxu0 0.0
    %385 = vmatprep.subr.mxu0 0.0
    %386 = vmatpush1.msra.mxu0 0.0
    %387 = vmatprep.subr.mxu0 0.0
    %388 = vmatpush1.msra.mxu0 0.0
    %389 = vmatprep.subr.mxu0 0.0
    %390 = vmatpush1.msra.mxu0 0.0
    %391 = vmatprep.subr.mxu0 0.0
    %392 = vmatpush1.msra.mxu0 0.0
    %393 = vmatprep.subr.mxu0 0.0
    %394 = vmatpush1.msra.mxu0 0.0
    %395 = vmatprep.subr.mxu0 0.0
    %396 = vmatpush1.msra.mxu0 0.0
    %397 = vmatprep.subr.mxu0 0.0
    %398 = vmatpush1.msra.mxu0 0.0
    %399 = vmatprep.subr.mxu0 0.0
    %400 = vmatpush1.msra.mxu0 0.0
    %401 = vmatprep.subr.mxu0 0.0
    %402 = vmatpush1.msra.mxu0 0.0
    %403 = vmatprep.subr.mxu0 0.0
    %404 = vmatpush1.msra.mxu0 0.0
    %405 = vmatprep.mubr.f32.mxu0 0.0
    %406 = vmatmul.mubr.f32.gmra.mrb[0].mxu0 %v290
    %v407 = vpop.f32.mrb[0].mxu0
    %v408 = vadd.f32 0.0, %v407
    %v409 = vpop.f32.mrb[0].mxu0
    %v410 = vadd.f32 0.0, %v409
    %411 = vdwg.mxu0
    %412 = vmatprep.subr.mxu0 0.0
    %413 = vmatpush1.msra.mxu0 %v295
    %414 = vmatprep.subr.mxu0 0.0
    %415 = vmatpush1.msra.mxu0 %v298
    %416 = vmatprep.subr.mxu0 0.0
    %417 = vmatpush1.msra.mxu0 %v301
    %418 = vmatprep.subr.mxu0 0.0
    %419 = vmatpush1.msra.mxu0 %v304
    %420 = vmatprep.subr.mxu0 0.0
    %421 = vmatpush1.msra.mxu0 %v307
    %422 = vmatprep.subr.mxu0 0.0
    %423 = vmatpush1.msra.mxu0 %v310
    %424 = vmatprep.subr.mxu0 0.0
    %425 = vmatpush1.msra.mxu0 %v313
    %426 = vmatprep.subr.mxu0 0.0
    %427 = vmatpush1.msra.mxu0 %v316
    %428 = vmatprep.subr.mxu0 0.0
    %429 = vmatpush1.msra.mxu0 %v319
    %430 = vmatprep.subr.mxu0 0.0
    %431 = vmatpush1.msra.mxu0 %v322
    %432 = vmatprep.subr.mxu0 0.0
    %433 = vmatpush1.msra.mxu0 %v325
    %434 = vmatprep.subr.mxu0 0.0
    %435 = vmatpush1.msra.mxu0 %v328
    %436 = vmatprep.subr.mxu0 0.0
    %437 = vmatpush1.msra.mxu0 %v331
    %438 = vmatprep.subr.mxu0 0.0
    %439 = vmatpush1.msra.mxu0 %v334
    %440 = vmatprep.subr.mxu0 0.0
    %441 = vmatpush1.msra.mxu0 %v337
    %442 = vmatprep.subr.mxu0 0.0
    %443 = vmatpush1.msra.mxu0 %v340
    %444 = vmatprep.subr.mxu0 0.0
    %445 = vmatpush1.msra.mxu0 0.0
    %446 = vmatprep.subr.mxu0 0.0
    %447 = vmatpush1.msra.mxu0 0.0
    %448 = vmatprep.subr.mxu0 0.0
    %449 = vmatpush1.msra.mxu0 0.0
    %450 = vmatprep.subr.mxu0 0.0
    %451 = vmatpush1.msra.mxu0 0.0
    %452 = vmatprep.subr.mxu0 0.0
    %453 = vmatpush1.msra.mxu0 0.0
    %454 = vmatprep.subr.mxu0 0.0
    %455 = vmatpush1.msra.mxu0 0.0
    %456 = vmatprep.subr.mxu0 0.0
    %457 = vmatpush1.msra.mxu0 0.0
    %458 = vmatprep.subr.mxu0 0.0
    %459 = vmatpush1.msra.mxu0 0.0
    %460 = vmatprep.subr.mxu0 0.0
    %461 = vmatpush1.msra.mxu0 0.0
    %462 = vmatprep.subr.mxu0 0.0
    %463 = vmatpush1.msra.mxu0 0.0
    %464 = vmatprep.subr.mxu0 0.0
    %465 = vmatpush1.msra.mxu0 0.0
    %466 = vmatprep.subr.mxu0 0.0
    %467 = vmatpush1.msra.mxu0 0.0
    %468 = vmatprep.subr.mxu0 0.0
    %469 = vmatpush1.msra.mxu0 0.0
    %470 = vmatprep.subr.mxu0 0.0
    %471 = vmatpush1.msra.mxu0 0.0
    %472 = vmatprep.subr.mxu0 0.0
    %473 = vmatpush1.msra.mxu0 0.0
    %474 = vmatprep.subr.mxu0 0.0
    %475 = vmatpush1.msra.mxu0 0.0
    %476 = vmatprep.mubr.f32.mxu0 0.0
    %477 = vmatmul.mubr.f32.gmra.mrb[0].mxu0 %v290
    %v478 = vpop.f32.mrb[0].mxu0
    %v479 = vadd.f32 0.0, %v478
    %v480 = vpop.f32.mrb[0].mxu0
    %481 = vdwg.mxu0
    %v482 = vadd.f32 %v292, %v408
    %v483 = vxor.u32 %v482, 2147483648
    %v484 = vmul.f32 %v483, 1.442695
    %v485 = vpow.pop %v484
    %v486 = vadd.f32 %v485, 1.0
    %v487 = vrcp.pop %v486
    %v488 = vmul.f32 1.0, %v487
    %v490 = vrot.slane %v292, 1
    %v492 = vadd.f32 %v490, %v410
    %v493 = vxor.u32 %v492, 2147483648
    %v494 = vmul.f32 %v493, 1.442695
    %v495 = vpow.pop %v494
    %v496 = vadd.f32 %v495, 1.0
    %v497 = vrcp.pop %v496
    %v498 = vmul.f32 1.0, %v497
    %v499 = vld [vmem:[%s2] sm:$0x1]
    %v500 = vadd.f32 %v479, %v499
    %v501 = vmul.f32 %v488, %v500
    %v502 = vrot.slane %v292, 2
    %v504 = vadd.f32 %v502, %v501
    %v505 = vtanh.pop %v504
    %v506 = vsub.f32 1.0, %v498
    %v507 = vmul.f32 %v506, %v505
    %v508 = vmul.f32 %v498, %v290
    %v509 = vadd.f32 %v507, %v508
    %510 = vst [vmem:[#allocation10] sm:$0x1] %v509
    %511 = vst [vmem:[#allocation2 + $0x1] sm:$0x1] %v509
    %v512 = vld [vmem:[#allocation10] sm:$0x1]
    %s513 = scalar_lea.vmem [#allocation3], 2
    %v514 = vld [vmem:[%s513] ss:$8 sm:$0x7]
    %v515 = vld [vmem:[#allocation6] sm:$0xff]
    %v516 = vld [vmem:[#allocation6 + $0x8] sm:$0xff]
    %v517 = vld [vmem:[#allocation6 + $0x10] sm:$0xff]
    %v518 = vld [vmem:[#allocation6 + $0x18] sm:$0xff]
    %v519 = vld [vmem:[#allocation6 + $0x20] sm:$0xff]
    %v520 = vld [vmem:[#allocation6 + $0x28] sm:$0xff]
    %v521 = vld [vmem:[#allocation6 + $0x30] sm:$0xff]
    %v522 = vld [vmem:[#allocation6 + $0x38] sm:$0xff]
    %v523 = vld [vmem:[#allocation6 + $0x40] sm:$0xff]
    %v524 = vld [vmem:[#allocation6 + $0x48] sm:$0xff]
    %v525 = vld [vmem:[#allocation6 + $0x50] sm:$0xff]
    %v526 = vld [vmem:[#allocation6 + $0x58] sm:$0xff]
    %v527 = vld [vmem:[#allocation6 + $0x60] sm:$0xff]
    %v528 = vld [vmem:[#allocation6 + $0x68] sm:$0xff]
    %v529 = vld [vmem:[#allocation6 + $0x70] sm:$0xff]
    %v530 = vld [vmem:[#allocation6 + $0x78] sm:$0xff]
    %v531 = vld [vmem:[#allocation6 + $0x80] sm:$0xff]
    %v532 = vld [vmem:[#allocation6 + $0x88] sm:$0xff]
    %v533 = vld [vmem:[#allocation6 + $0x90] sm:$0xff]
    %v534 = vld [vmem:[#allocation6 + $0x98] sm:$0xff]
    %v535 = vld [vmem:[#allocation6 + $0xa0] sm:$0xff]
    %v536 = vld [vmem:[#allocation6 + $0xa8] sm:$0xff]
    %v537 = vld [vmem:[#allocation6 + $0xb0] sm:$0xff]
    %v538 = vld [vmem:[#allocation6 + $0xb8] sm:$0xff]
    %v539 = vld [vmem:[#allocation6 + $0xc0] sm:$0xff]
    %v540 = vld [vmem:[#allocation6 + $0xc8] sm:$0xff]
    %v541 = vld [vmem:[#allocation6 + $0xd0] sm:$0xff]
    %v542 = vld [vmem:[#allocation6 + $0xd8] sm:$0xff]
    %v543 = vld [vmem:[#allocation6 + $0xe0] sm:$0xff]
    %v544 = vld [vmem:[#allocation6 + $0xe8] sm:$0xff]
    %v545 = vld [vmem:[#allocation6 + $0xf0] sm:$0xff]
    %v546 = vld [vmem:[#allocation6 + $0xf8] sm:$0xff]
    %v547 = vld [vmem:[#allocation6 + $0x100] sm:$0xff]
    %v548 = vld [vmem:[#allocation6 + $0x108] sm:$0xff]
    %v549 = vld [vmem:[#allocation6 + $0x110] sm:$0xff]
    %v550 = vld [vmem:[#allocation6 + $0x118] sm:$0xff]
    %v551 = vld [vmem:[#allocation6 + $0x120] sm:$0xff]
    %v552 = vld [vmem:[#allocation6 + $0x128] sm:$0xff]
    %v553 = vld [vmem:[#allocation6 + $0x130] sm:$0xff]
    %v554 = vld [vmem:[#allocation6 + $0x138] sm:$0xff]
    %v555 = vld [vmem:[#allocation6 + $0x140] sm:$0xff]
    %v556 = vld [vmem:[#allocation6 + $0x148] sm:$0xff]
    %v557 = vld [vmem:[#allocation6 + $0x150] sm:$0xff]
    %v558 = vld [vmem:[#allocation6 + $0x158] sm:$0xff]
    %v559 = vld [vmem:[#allocation6 + $0x160] sm:$0xff]
    %v560 = vld [vmem:[#allocation6 + $0x168] sm:$0xff]
    %v561 = vld [vmem:[#allocation6 + $0x170] sm:$0xff]
    %v562 = vld [vmem:[#allocation6 + $0x178] sm:$0xff]
    %563 = vmatprep.subr.mxu0 %v516
    %564 = vmatpush1.msra.mxu0 %v515
    %565 = vmatprep.subr.mxu0 %v519
    %566 = vmatpush1.msra.mxu0 %v518
    %567 = vmatprep.subr.mxu0 %v522
    %568 = vmatpush1.msra.mxu0 %v521
    %569 = vmatprep.subr.mxu0 %v525
    %570 = vmatpush1.msra.mxu0 %v524
    %571 = vmatprep.subr.mxu0 %v528
    %572 = vmatpush1.msra.mxu0 %v527
    %573 = vmatprep.subr.mxu0 %v531
    %574 = vmatpush1.msra.mxu0 %v530
    %575 = vmatprep.subr.mxu0 %v534
    %576 = vmatpush1.msra.mxu0 %v533
    %577 = vmatprep.subr.mxu0 %v537
    %578 = vmatpush1.msra.mxu0 %v536
    %579 = vmatprep.subr.mxu0 %v540
    %580 = vmatpush1.msra.mxu0 %v539
    %581 = vmatprep.subr.mxu0 %v543
    %582 = vmatpush1.msra.mxu0 %v542
    %583 = vmatprep.subr.mxu0 %v546
    %584 = vmatpush1.msra.mxu0 %v545
    %585 = vmatprep.subr.mxu0 %v549
    %586 = vmatpush1.msra.mxu0 %v548
    %587 = vmatprep.subr.mxu0 %v552
    %588 = vmatpush1.msra.mxu0 %v551
    %589 = vmatprep.subr.mxu0 %v555
    %590 = vmatpush1.msra.mxu0 %v554
    %591 = vmatprep.subr.mxu0 %v558
    %592 = vmatpush1.msra.mxu0 %v557
    %593 = vmatprep.subr.mxu0 %v561
    %594 = vmatpush1.msra.mxu0 %v560
    %595 = vmatprep.subr.mxu0 0.0
    %596 = vmatpush1.msra.mxu0 0.0
    %597 = vmatprep.subr.mxu0 0.0
    %598 = vmatpush1.msra.mxu0 0.0
    %599 = vmatprep.subr.mxu0 0.0
    %600 = vmatpush1.msra.mxu0 0.0
    %601 = vmatprep.subr.mxu0 0.0
    %602 = vmatpush1.msra.mxu0 0.0
    %603 = vmatprep.subr.mxu0 0.0
    %604 = vmatpush1.msra.mxu0 0.0
    %605 = vmatprep.subr.mxu0 0.0
    %606 = vmatpush1.msra.mxu0 0.0
    %607 = vmatprep.subr.mxu0 0.0
    %608 = vmatpush1.msra.mxu0 0.0
    %609 = vmatprep.subr.mxu0 0.0
    %610 = vmatpush1.msra.mxu0 0.0
    %611 = vmatprep.subr.mxu0 0.0
    %612 = vmatpush1.msra.mxu0 0.0
    %613 = vmatprep.subr.mxu0 0.0
    %614 = vmatpush1.msra.mxu0 0.0
    %615 = vmatprep.subr.mxu0 0.0
    %616 = vmatpush1.msra.mxu0 0.0
    %617 = vmatprep.subr.mxu0 0.0
    %618 = vmatpush1.msra.mxu0 0.0
    %619 = vmatprep.subr.mxu0 0.0
    %620 = vmatpush1.msra.mxu0 0.0
    %621 = vmatprep.subr.mxu0 0.0
    %622 = vmatpush1.msra.mxu0 0.0
    %623 = vmatprep.subr.mxu0 0.0
    %624 = vmatpush1.msra.mxu0 0.0
    %625 = vmatprep.subr.mxu0 0.0
    %626 = vmatpush1.msra.mxu0 0.0
    %627 = vmatprep.mubr.f32.mxu0 0.0
    %628 = vmatmul.mubr.f32.gmra.mrb[0].mxu0 %v512
    %v629 = vpop.f32.mrb[0].mxu0
    %v630 = vadd.f32 0.0, %v629
    %v631 = vpop.f32.mrb[0].mxu0
    %v632 = vadd.f32 0.0, %v631
    %633 = vdwg.mxu0
    %634 = vmatprep.subr.mxu0 0.0
    %635 = vmatpush1.msra.mxu0 %v517
    %636 = vmatprep.subr.mxu0 0.0
    %637 = vmatpush1.msra.mxu0 %v520
    %638 = vmatprep.subr.mxu0 0.0
    %639 = vmatpush1.msra.mxu0 %v523
    %640 = vmatprep.subr.mxu0 0.0
    %641 = vmatpush1.msra.mxu0 %v526
    %642 = vmatprep.subr.mxu0 0.0
    %643 = vmatpush1.msra.mxu0 %v529
    %644 = vmatprep.subr.mxu0 0.0
    %645 = vmatpush1.msra.mxu0 %v532
    %646 = vmatprep.subr.mxu0 0.0
    %647 = vmatpush1.msra.mxu0 %v535
    %648 = vmatprep.subr.mxu0 0.0
    %649 = vmatpush1.msra.mxu0 %v538
    %650 = vmatprep.subr.mxu0 0.0
    %651 = vmatpush1.msra.mxu0 %v541
    %652 = vmatprep.subr.mxu0 0.0
    %653 = vmatpush1.msra.mxu0 %v544
    %654 = vmatprep.subr.mxu0 0.0
    %655 = vmatpush1.msra.mxu0 %v547
    %656 = vmatprep.subr.mxu0 0.0
    %657 = vmatpush1.msra.mxu0 %v550
    %658 = vmatprep.subr.mxu0 0.0
    %659 = vmatpush1.msra.mxu0 %v553
    %660 = vmatprep.subr.mxu0 0.0
    %661 = vmatpush1.msra.mxu0 %v556
    %662 = vmatprep.subr.mxu0 0.0
    %663 = vmatpush1.msra.mxu0 %v559
    %664 = vmatprep.subr.mxu0 0.0
    %665 = vmatpush1.msra.mxu0 %v562
    %666 = vmatprep.subr.mxu0 0.0
    %667 = vmatpush1.msra.mxu0 0.0
    %668 = vmatprep.subr.mxu0 0.0
    %669 = vmatpush1.msra.mxu0 0.0
    %670 = vmatprep.subr.mxu0 0.0
    %671 = vmatpush1.msra.mxu0 0.0
    %672 = vmatprep.subr.mxu0 0.0
    %673 = vmatpush1.msra.mxu0 0.0
    %674 = vmatprep.subr.mxu0 0.0
    %675 = vmatpush1.msra.mxu0 0.0
    %676 = vmatprep.subr.mxu0 0.0
    %677 = vmatpush1.msra.mxu0 0.0
    %678 = vmatprep.subr.mxu0 0.0
    %679 = vmatpush1.msra.mxu0 0.0
    %680 = vmatprep.subr.mxu0 0.0
    %681 = vmatpush1.msra.mxu0 0.0
    %682 = vmatprep.subr.mxu0 0.0
    %683 = vmatpush1.msra.mxu0 0.0
    %684 = vmatprep.subr.mxu0 0.0
    %685 = vmatpush1.msra.mxu0 0.0
    %686 = vmatprep.subr.mxu0 0.0
    %687 = vmatpush1.msra.mxu0 0.0
    %688 = vmatprep.subr.mxu0 0.0
    %689 = vmatpush1.msra.mxu0 0.0
    %690 = vmatprep.subr.mxu0 0.0
    %691 = vmatpush1.msra.mxu0 0.0
    %692 = vmatprep.subr.mxu0 0.0
    %693 = vmatpush1.msra.mxu0 0.0
    %694 = vmatprep.subr.mxu0 0.0
    %695 = vmatpush1.msra.mxu0 0.0
    %696 = vmatprep.subr.mxu0 0.0
    %697 = vmatpush1.msra.mxu0 0.0
    %698 = vmatprep.mubr.f32.mxu0 0.0
    %699 = vmatmul.mubr.f32.gmra.mrb[0].mxu0 %v512
    %v700 = vpop.f32.mrb[0].mxu0
    %v701 = vadd.f32 0.0, %v700
    %v702 = vpop.f32.mrb[0].mxu0
    %703 = vdwg.mxu0
    %v704 = vadd.f32 %v514, %v630
    %v705 = vxor.u32 %v704, 2147483648
    %v706 = vmul.f32 %v705, 1.442695
    %v707 = vpow.pop %v706
    %v708 = vadd.f32 %v707, 1.0
    %v709 = vrcp.pop %v708
    %v710 = vmul.f32 1.0, %v709
    %v712 = vrot.slane %v514, 1
    %v714 = vadd.f32 %v712, %v632
    %v715 = vxor.u32 %v714, 2147483648
    %v716 = vmul.f32 %v715, 1.442695
    %v717 = vpow.pop %v716
    %v718 = vadd.f32 %v717, 1.0
    %v719 = vrcp.pop %v718
    %v720 = vmul.f32 1.0, %v719
    %v721 = vld [vmem:[%s2] sm:$0x1]
    %v722 = vadd.f32 %v701, %v721
    %v723 = vmul.f32 %v710, %v722
    %v724 = vrot.slane %v514, 2
    %v726 = vadd.f32 %v724, %v723
    %v727 = vtanh.pop %v726
    %v728 = vsub.f32 1.0, %v720
    %v729 = vmul.f32 %v728, %v727
    %v730 = vmul.f32 %v720, %v512
    %v731 = vadd.f32 %v729, %v730
    %732 = vst [vmem:[#allocation10] sm:$0x1] %v731
    %733 = vst [vmem:[#allocation2 + $0x2] sm:$0x1] %v731
    %v734 = vld [vmem:[#allocation2] sm:$0xff]
    %v735 = vld [vmem:[#allocation8] sm:$0xff]
    %v736 = vld [vmem:[#allocation8 + $0x8] sm:$0xff]
    %v737 = vld [vmem:[#allocation8 + $0x10] sm:$0xff]
    %v738 = vld [vmem:[#allocation8 + $0x18] sm:$0xff]
    %v739 = vld [vmem:[#allocation8 + $0x20] sm:$0xff]
    %v740 = vld [vmem:[#allocation8 + $0x28] sm:$0xff]
    %v741 = vld [vmem:[#allocation8 + $0x30] sm:$0xff]
    %v742 = vld [vmem:[#allocation8 + $0x38] sm:$0xff]
    %v743 = vld [vmem:[#allocation8 + $0x40] sm:$0xff]
    %v744 = vld [vmem:[#allocation8 + $0x48] sm:$0xff]
    %v745 = vld [vmem:[#allocation8 + $0x50] sm:$0xff]
    %v746 = vld [vmem:[#allocation8 + $0x58] sm:$0xff]
    %v747 = vld [vmem:[#allocation8 + $0x60] sm:$0xff]
    %v748 = vld [vmem:[#allocation8 + $0x68] sm:$0xff]
    %v749 = vld [vmem:[#allocation8 + $0x70] sm:$0xff]
    %v750 = vld [vmem:[#allocation8 + $0x78] sm:$0xff]
    %v751 = vld [vmem:[%s5] sm:$0x1]
    %v753 = vlaneseq
    %v754 = vshrl.u32 %v753, 7
    %v755 = vsub.s32 0, %v754
    %v756 = vrot.slane %v751, %v755
    %758 = vmatprep.subr.mxu0 0.0
    %759 = vmatpush1.msra.mxu0 %v735
    %760 = vmatprep.subr.mxu0 0.0
    %761 = vmatpush1.msra.mxu0 %v736
    %762 = vmatprep.subr.mxu0 0.0
    %763 = vmatpush1.msra.mxu0 %v737
    %764 = vmatprep.subr.mxu0 0.0
    %765 = vmatpush1.msra.mxu0 %v738
    %766 = vmatprep.subr.mxu0 0.0
    %767 = vmatpush1.msra.mxu0 %v739
    %768 = vmatprep.subr.mxu0 0.0
    %769 = vmatpush1.msra.mxu0 %v740
    %770 = vmatprep.subr.mxu0 0.0
    %771 = vmatpush1.msra.mxu0 %v741
    %772 = vmatprep.subr.mxu0 0.0
    %773 = vmatpush1.msra.mxu0 %v742
    %774 = vmatprep.subr.mxu0 0.0
    %775 = vmatpush1.msra.mxu0 %v743
    %776 = vmatprep.subr.mxu0 0.0
    %777 = vmatpush1.msra.mxu0 %v744
    %778 = vmatprep.subr.mxu0 0.0
    %779 = vmatpush1.msra.mxu0 %v745
    %780 = vmatprep.subr.mxu0 0.0
    %781 = vmatpush1.msra.mxu0 %v746
    %782 = vmatprep.subr.mxu0 0.0
    %783 = vmatpush1.msra.mxu0 %v747
    %784 = vmatprep.subr.mxu0 0.0
    %785 = vmatpush1.msra.mxu0 %v748
    %786 = vmatprep.subr.mxu0 0.0
    %787 = vmatpush1.msra.mxu0 %v749
    %788 = vmatprep.subr.mxu0 0.0
    %789 = vmatpush1.msra.mxu0 %v750
    %790 = vmatprep.subr.mxu0 0.0
    %791 = vmatpush1.msra.mxu0 0.0
    %792 = vmatprep.subr.mxu0 0.0
    %793 = vmatpush1.msra.mxu0 0.0
    %794 = vmatprep.subr.mxu0 0.0
    %795 = vmatpush1.msra.mxu0 0.0
    %796 = vmatprep.subr.mxu0 0.0
    %797 = vmatpush1.msra.mxu0 0.0
    %798 = vmatprep.subr.mxu0 0.0
    %799 = vmatpush1.msra.mxu0 0.0
    %800 = vmatprep.subr.mxu0 0.0
    %801 = vmatpush1.msra.mxu0 0.0
    %802 = vmatprep.subr.mxu0 0.0
    %803 = vmatpush1.msra.mxu0 0.0
    %804 = vmatprep.subr.mxu0 0.0
    %805 = vmatpush1.msra.mxu0 0.0
    %806 = vmatprep.subr.mxu0 0.0
    %807 = vmatpush1.msra.mxu0 0.0
    %808 = vmatprep.subr.mxu0 0.0
    %809 = vmatpush1.msra.mxu0 0.0
    %810 = vmatprep.subr.mxu0 0.0
    %811 = vmatpush1.msra.mxu0 0.0
    %812 = vmatprep.subr.mxu0 0.0
    %813 = vmatpush1.msra.mxu0 0.0
    %814 = vmatprep.subr.mxu0 0.0
    %815 = vmatpush1.msra.mxu0 0.0
    %816 = vmatprep.subr.mxu0 0.0
    %817 = vmatpush1.msra.mxu0 0.0
    %818 = vmatprep.subr.mxu0 0.0
    %819 = vmatpush1.msra.mxu0 0.0
    %820 = vmatprep.subr.mxu0 0.0
    %821 = vmatpush1.msra.mxu0 0.0
    %822 = vmatprep.mubr.f32.mxu0 0.0
    %823 = vmatmul.mubr.f32.gmra.mrb[0].mxu0 %v734
    %v824 = vpop.f32.mrb[0].mxu0
    %v825 = vadd.f32 %v756, %v824
    %v826 = vpop.f32.mrb[0].mxu0
    %827 = vdwg.mxu0
    %828 = vmax.xlane.f32.xlu0 %v825
    %v829 = vpop.xlane.xlu0 %828
    %v830 = vsub.f32 %v825, %v829
    %v831 = vmul.f32 %v830, 1.442695
    %v832 = vpow.pop %v831
    %833 = vadd.xlane.f32.xlu0 %v832
    %v834 = vpop.xlane.xlu0 %833
    %v835 = vlog2.pop %v834
    %v836 = vmul.f32 %v835, 0.6931472
    %v837 = vsub.f32 %v830, %v836
    %838 = vst [vmem:[#allocation9] sm:$0xff] %v837
    // Predicated region
    $region38: #{tpu_custom_call.1} parent=1 // pred_check
      _
    $region39: #{tpu_custom_call.1} parent=1 // pred_check_branch
      %840 = sbr.rel (0) target = $region41
    $region40: #{tpu_custom_call.1} parent=1 // pred_region
      %s842 = ssub.s32 128, 128
      %843 = vsyncadd [#allocation5], %s842
      %s845 = sshll.u32 [#allocation9], 4
      %s846 = int_to_ptr.vmem [resolvable:$true] %s845
      %848 = dma.vmem_to_hbm [thread:$0]  %s846, 128, %s6, [#allocation5]
    $region41: #{tpu_custom_call.1} parent=1 // pred_fallthru
      _
    // Predicated region
    $region42: #{tpu_custom_call.1} parent=1 // pred_check
      _
    $region43: #{tpu_custom_call.1} parent=1 // pred_check_branch
      %850 = sbr.rel (0) target = $region45
    $region44: #{tpu_custom_call.1} parent=1 // pred_region
      %s852 = ssub.s32 16, 16
      %853 = vsyncadd [#allocation11], %s852
      %s855 = sshll.u32 [#allocation10], 4
      %s856 = int_to_ptr.vmem [resolvable:$true] %s855
      %858 = dma.vmem_to_hbm [thread:$0]  %s856, 16, %s7, [#allocation11]
    $region45: #{tpu_custom_call.1} parent=1 // pred_fallthru
      _
    // Predicated region
    $region46: #{tpu_custom_call.1} parent=1 // pred_check
      _
    $region47: #{tpu_custom_call.1} parent=1 // pred_check_branch
      %860 = sbr.rel (0) target = $region49
    $region48: #{tpu_custom_call.1} parent=1 // pred_region
      %861 = dma.done [#allocation5], 128
    $region49: #{tpu_custom_call.1} parent=1 // pred_fallthru
      _
    // Predicated region
    $region50: #{tpu_custom_call.1} parent=1 // pred_check
      _
    $region51: #{tpu_custom_call.1} parent=1 // pred_check_branch
      %863 = sbr.rel (0) target = $region53
    $region52: #{tpu_custom_call.1} parent=1 // pred_region
      %864 = dma.done [#allocation11], 16
    $region53: #{tpu_custom_call.1} parent=1 // pred_fallthru
      _
    %865 = vsyncpa [#allocation4], 1
    %866 = vsyncpa [#allocation7], 1
    %867 = vsyncpa [#allocation5], 1
    %868 = vsyncpa [#allocation11], 1

</llo_original>
